<compile_context>
chip_gen: v7x
topology: tpu7x:2x2x1
jax: 0.10.0
libtpu: 0.0.40
codegen_flags: <defaults>
</compile_context>

<pallas_src>
import functools

import jax
import jax.numpy as jnp
from jax.experimental import pallas as pl
from jax.experimental.pallas import tpu as pltpu


def _gin_kernel(x_ref, w1_ref, b1_ref, w2_ref, b2_ref,
                w3s_ref, b3s_ref, w3t_ref, b3t_ref, y_ref,
                *, split_size: int):
    """Transposed-layout GIN coupling. Activations are [C, TB]: batch on lanes."""
    S = split_size
    x0 = x_ref[:S, :]                    # [S, TB]
    x1 = x_ref[S:, :]                    # [S, TB]

    # --- MLP hot path: Linear -> ReLU -> Linear -> ReLU -> Linear (pre-transposed W) ---
    h = jnp.dot(w1_ref[...], x0, preferred_element_type=jnp.float32) + b1_ref[...]
    h = jnp.maximum(h, 0.0)
    h = jnp.dot(w2_ref[...], h, preferred_element_type=jnp.float32) + b2_ref[...]
    h = jnp.maximum(h, 0.0)
    # Layer 3 pre-split into s / t halves -> no sublane-unaligned slice of `st`.
    s = jnp.dot(w3s_ref[...], h, preferred_element_type=jnp.float32) + b3s_ref[...]  # [S-1, TB]
    t = jnp.dot(w3t_ref[...], h, preferred_element_type=jnp.float32) + b3t_ref[...]  # [S,   TB]

    s = 0.1 * jnp.tanh(s)                                  # EUP (f32)
    s_last = -jnp.sum(s, axis=0, keepdims=True)            # [1, TB] sublane reduce (XLU)
    s_full = jnp.concatenate([s, s_last], axis=0)          # [S, TB] sublane concat

    transformed = x1 * jnp.exp(s_full) + t                 # [S, TB]

    # Single full-lane-width store of the assembled [C, TB] output tile.
    y_ref[...] = jnp.concatenate([transformed, x0], axis=0).astype(y_ref.dtype)


def _round_up(n: int, m: int) -> int:
    return ((n + m - 1) // m) * m


def gin_layer_forward(x, params, *, block_b: int = 32768):
    """GIN affine-coupling forward. x: [B, C] float32 with C even.

    block_b: target batch-tile size (rows). Rounded to a multiple of 128; the
    batch is split into near-equal 128-aligned chunks so padding waste stays
    bounded (~127 rows/chunk) while each DMA block stays large (~1 MiB).
    """
    B, C = x.shape
    S = C // 2
    H = params["w1"].shape[1]

    # --- tile selection: few large, near-equal, 128-aligned batch chunks -------
    block_b = max(128, _round_up(block_b, 128))
    n_blocks = max(1, pl.cdiv(B, block_b))
    tb = _round_up(pl.cdiv(B, n_blocks), 128)   # lane-dense tile (multiple of 128)
    b_pad = n_blocks * tb
    grid = (n_blocks,)

    # Lane-dense layout: batch on the 128-wide lane axis, features on sublanes.
    x_t = jnp.pad(x.T, ((0, 0), (0, b_pad - B)))            # [C, b_pad]

    # Pre-transpose weights (kernel computes W^T @ x^T) and pre-split layer 3.
    w1t = params["w1"].T                                    # [H, S]
    b1t = params["b1"].reshape(H, 1)
    w2t = params["w2"].T                                    # [H, H]
    b2t = params["b2"].reshape(H, 1)
    w3 = params["w3"]                                       # [H, 2S-1]
    b3 = params["b3"].reshape(-1)                           # [2S-1]
    w3s = w3[:, :S - 1].T                                   # [S-1, H]
    b3s = b3[:S - 1].reshape(S - 1, 1)
    w3t = w3[:, S - 1:].T                                   # [S, H]
    b3t = b3[S - 1:].reshape(S, 1)

    kernel = functools.partial(_gin_kernel, split_size=S)

    def _const(shape):
        # Tiny weight array: same block every step -> resident in VMEM.
        return pl.BlockSpec(shape, lambda i: (0,) * len(shape))

    weight_bytes = 4 * (w1t.size + b1t.size + w2t.size + b2t.size +
                        w3s.size + b3s.size + w3t.size + b3t.size)
    cost = pl.CostEstimate(
        flops=2 * b_pad * (S * H + H * H + H * (2 * S - 1)) + 8 * b_pad * S,
        transcendentals=b_pad * (2 * S - 1),                # tanh + exp
        bytes_accessed=2 * b_pad * C * 4 + weight_bytes,
    )

    y_t = pl.pallas_call(
        kernel,
        out_shape=jax.ShapeDtypeStruct((C, b_pad), x.dtype),
        grid=grid,
        in_specs=[
            pl.BlockSpec((C, tb), lambda i: (0, i)),        # activations: batch-tiled
            _const(w1t.shape), _const(b1t.shape),
            _const(w2t.shape), _const(b2t.shape),
            _const(w3s.shape), _const(b3s.shape),
            _const(w3t.shape), _const(b3t.shape),
        ],
        out_specs=pl.BlockSpec((C, tb), lambda i: (0, i)),
        compiler_params=pltpu.CompilerParams(
            dimension_semantics=("parallel",)),             # megacore sharding on v7x
        cost_estimate=cost,
    )(x_t, w1t, b1t, w2t, b2t, w3s, b3s, w3t, b3t)

    return y_t[:, :B].T                                     # [B, C]


def init_gin_params(key, in_channels: int, hidden_size: int = 32,
                    dtype=jnp.float32):
    """Deterministic synthetic init for the GIN MLP (n_layers=3).

    MLP: Linear(S -> H), ReLU, Linear(H -> H), ReLU, Linear(H -> 2S-1).
    Weights are stored [in, out]; biases are [1, out].
    """
    S = in_channels // 2
    H = hidden_size
    out_dim = 2 * S - 1
    k1, k2, k3, k4, k5, k6 = jax.random.split(key, 6)
    scale = 0.1
    return {
        "w1": scale * jax.random.normal(k1, (S, H), dtype),
        "b1": scale * jax.random.normal(k2, (1, H), dtype),
        "w2": scale * jax.random.normal(k3, (H, H), dtype),
        "b2": scale * jax.random.normal(k4, (1, H), dtype),
        "w3": scale * jax.random.normal(k5, (H, out_dim), dtype),
        "b3": scale * jax.random.normal(k6, (1, out_dim), dtype),
    }


def gin_layer_reference(x, params):
    """Pure-JAX reference matching the PyTorch forward exactly."""
    C = x.shape[-1]
    S = C // 2
    x0, x1 = x[..., :S], x[..., S:]
    h = jnp.maximum(x0 @ params["w1"] + params["b1"], 0.0)
    h = jnp.maximum(h @ params["w2"] + params["b2"], 0.0)
    st = h @ params["w3"] + params["b3"]
    n = st.shape[-1]
    s, t = st[..., : n // 2], st[..., n // 2:]
    s = 0.1 * jnp.tanh(s)
    s = jnp.concatenate([s, -jnp.sum(s, axis=-1, keepdims=True)], axis=-1)
    transformed = x1 * jnp.exp(s) + t
    return jnp.concatenate([transformed, x0], axis=-1)


if __name__ == "__main__":
    key = jax.random.PRNGKey(0)
    kx, kp = jax.random.split(key)

    B = 8            # batch rows
    in_channels = 8  # must be even -> split_size = 4
    hidden = 32

    x = jax.random.normal(kx, (B, in_channels), jnp.float32)
    params = init_gin_params(kp, in_channels, hidden)

    y = jax.block_until_ready(gin_layer_forward(x, params))
    y_ref = gin_layer_reference(x, params)
    assert y.shape == (B, in_channels)
    assert jnp.allclose(y, y_ref, atol=1e-4, rtol=1e-4)

    # Exercise the multi-block grid + tail padding path (3 blocks of 128, 84 pad rows).
    B2 = 300
    x2 = jax.random.normal(kx, (B2, in_channels), jnp.float32)
    y2 = jax.block_until_ready(gin_layer_forward(x2, params, block_b=128))
    y2_ref = gin_layer_reference(x2, params)
    assert y2.shape == (B2, in_channels)
    assert jnp.allclose(y2, y2_ref, atol=1e-4, rtol=1e-4)

    # Default (large-tile) path on a bigger, non-multiple batch.
    B3 = 1000
    x3 = jax.random.normal(kx, (B3, in_channels), jnp.float32)
    y3 = jax.block_until_ready(gin_layer_forward(x3, params))
    y3_ref = gin_layer_reference(x3, params)
    assert y3.shape == (B3, in_channels)
    assert jnp.allclose(y3, y3_ref, atol=1e-4, rtol=1e-4)

    print("KERNEL_OK")
</pallas_src>

<mosaic_0001>
module attributes {stable_mosaic.version = 11 : i64} {
  func.func @_gin_kernel(%arg0: i32, %arg1: memref<8x128xf32, #tpu.memory_space<vmem>>, %arg2: memref<32x4xf32, #tpu.memory_space<vmem>>, %arg3: memref<32x1xf32, #tpu.memory_space<vmem>>, %arg4: memref<32x32xf32, #tpu.memory_space<vmem>>, %arg5: memref<32x1xf32, #tpu.memory_space<vmem>>, %arg6: memref<3x32xf32, #tpu.memory_space<vmem>>, %arg7: memref<3x1xf32, #tpu.memory_space<vmem>>, %arg8: memref<4x32xf32, #tpu.memory_space<vmem>>, %arg9: memref<4x1xf32, #tpu.memory_space<vmem>>, %arg10: memref<8x128xf32, #tpu.memory_space<vmem>>) attributes {dimension_semantics = [#tpu.dimension_semantics<parallel>], iteration_bounds = array<i64: 1>, scalar_prefetch = 0 : i64, scratch_operands = 0 : i64, tpu.core_type = #tpu.core_type<tc>, window_params = [{transform_indices = @transform_0, window_bounds = array<i64: 8, 128>}, {pipeline_mode = #tpu.pipeline_mode<synchronous>, transform_indices = @transform_1, window_bounds = array<i64: 32, 4>}, {pipeline_mode = #tpu.pipeline_mode<synchronous>, transform_indices = @transform_2, window_bounds = array<i64: 32, 1>}, {pipeline_mode = #tpu.pipeline_mode<synchronous>, transform_indices = @transform_3, window_bounds = array<i64: 32, 32>}, {pipeline_mode = #tpu.pipeline_mode<synchronous>, transform_indices = @transform_4, window_bounds = array<i64: 32, 1>}, {pipeline_mode = #tpu.pipeline_mode<synchronous>, transform_indices = @transform_5, window_bounds = array<i64: 3, 32>}, {pipeline_mode = #tpu.pipeline_mode<synchronous>, transform_indices = @transform_6, window_bounds = array<i64: 3, 1>}, {pipeline_mode = #tpu.pipeline_mode<synchronous>, transform_indices = @transform_7, window_bounds = array<i64: 4, 32>}, {pipeline_mode = #tpu.pipeline_mode<synchronous>, transform_indices = @transform_8, window_bounds = array<i64: 4, 1>}, {transform_indices = @transform_9, window_bounds = array<i64: 8, 128>}]} {
    %c0 = arith.constant 0 : index
    %c0_0 = arith.constant 0 : index
    %0 = vector.load %arg1[%c0, %c0_0] : memref<8x128xf32, #tpu.memory_space<vmem>>, vector<4x128xf32>
    %c4 = arith.constant 4 : index
    %c0_1 = arith.constant 0 : index
    %1 = vector.load %arg1[%c4, %c0_1] : memref<8x128xf32, #tpu.memory_space<vmem>>, vector<4x128xf32>
    %c0_2 = arith.constant 0 : index
    %c0_3 = arith.constant 0 : index
    %2 = vector.load %arg2[%c0_2, %c0_3] : memref<32x4xf32, #tpu.memory_space<vmem>>, vector<32x4xf32>
    %cst = arith.constant dense<0.000000e+00> : vector<32x128xf32>
    %3 = tpu.matmul %2, %0, %cst {dimension_numbers = #tpu.dot_dimension_numbers<[1], [0], [0], [1], [0, 0, 1, 1], [], []>} : vector<32x4xf32>, vector<4x128xf32>, vector<32x128xf32> -> vector<32x128xf32>
    %c0_4 = arith.constant 0 : index
    %c0_5 = arith.constant 0 : index
    %4 = vector.load %arg3[%c0_4, %c0_5] : memref<32x1xf32, #tpu.memory_space<vmem>>, vector<32x1xf32>
    %5 = vector.broadcast %4 : vector<32x1xf32> to vector<32x128xf32>
    %6 = arith.addf %3, %5 : vector<32x128xf32>
    %cst_6 = arith.constant 0.000000e+00 : f32
    %7 = vector.broadcast %cst_6 : f32 to vector<32x128xf32>
    %8 = arith.maximumf %6, %7 : vector<32x128xf32>
    %c0_7 = arith.constant 0 : index
    %c0_8 = arith.constant 0 : index
    %9 = vector.load %arg4[%c0_7, %c0_8] : memref<32x32xf32, #tpu.memory_space<vmem>>, vector<32x32xf32>
    %cst_9 = arith.constant dense<0.000000e+00> : vector<32x128xf32>
    %10 = tpu.matmul %9, %8, %cst_9 {dimension_numbers = #tpu.dot_dimension_numbers<[1], [0], [0], [1], [0, 0, 1, 1], [], []>} : vector<32x32xf32>, vector<32x128xf32>, vector<32x128xf32> -> vector<32x128xf32>
    %c0_10 = arith.constant 0 : index
    %c0_11 = arith.constant 0 : index
    %11 = vector.load %arg5[%c0_10, %c0_11] : memref<32x1xf32, #tpu.memory_space<vmem>>, vector<32x1xf32>
    %12 = vector.broadcast %11 : vector<32x1xf32> to vector<32x128xf32>
    %13 = arith.addf %10, %12 : vector<32x128xf32>
    %cst_12 = arith.constant 0.000000e+00 : f32
    %14 = vector.broadcast %cst_12 : f32 to vector<32x128xf32>
    %15 = arith.maximumf %13, %14 : vector<32x128xf32>
    %c0_13 = arith.constant 0 : index
    %c0_14 = arith.constant 0 : index
    %16 = vector.load %arg6[%c0_13, %c0_14] : memref<3x32xf32, #tpu.memory_space<vmem>>, vector<3x32xf32>
    %cst_15 = arith.constant dense<0.000000e+00> : vector<3x128xf32>
    %17 = tpu.matmul %16, %15, %cst_15 {dimension_numbers = #tpu.dot_dimension_numbers<[1], [0], [0], [1], [0, 0, 1, 1], [], []>} : vector<3x32xf32>, vector<32x128xf32>, vector<3x128xf32> -> vector<3x128xf32>
    %c0_16 = arith.constant 0 : index
    %c0_17 = arith.constant 0 : index
    %18 = vector.load %arg7[%c0_16, %c0_17] : memref<3x1xf32, #tpu.memory_space<vmem>>, vector<3x1xf32>
    %19 = vector.broadcast %18 : vector<3x1xf32> to vector<3x128xf32>
    %20 = arith.addf %17, %19 : vector<3x128xf32>
    %c0_18 = arith.constant 0 : index
    %c0_19 = arith.constant 0 : index
    %21 = vector.load %arg8[%c0_18, %c0_19] : memref<4x32xf32, #tpu.memory_space<vmem>>, vector<4x32xf32>
    %cst_20 = arith.constant dense<0.000000e+00> : vector<4x128xf32>
    %22 = tpu.matmul %21, %15, %cst_20 {dimension_numbers = #tpu.dot_dimension_numbers<[1], [0], [0], [1], [0, 0, 1, 1], [], []>} : vector<4x32xf32>, vector<32x128xf32>, vector<4x128xf32> -> vector<4x128xf32>
    %c0_21 = arith.constant 0 : index
    %c0_22 = arith.constant 0 : index
    %23 = vector.load %arg9[%c0_21, %c0_22] : memref<4x1xf32, #tpu.memory_space<vmem>>, vector<4x1xf32>
    %24 = vector.broadcast %23 : vector<4x1xf32> to vector<4x128xf32>
    %25 = arith.addf %22, %24 : vector<4x128xf32>
    %26 = math.tanh %20 : vector<3x128xf32>
    %cst_23 = arith.constant 1.000000e-01 : f32
    %27 = vector.broadcast %cst_23 : f32 to vector<3x128xf32>
    %28 = arith.mulf %27, %26 : vector<3x128xf32>
    %cst_24 = arith.constant dense<0.000000e+00> : vector<128xf32>
    %29 = vector.multi_reduction <add>, %28, %cst_24 [0] : vector<3x128xf32> to vector<128xf32>
    %30 = vector.shape_cast %29 : vector<128xf32> to vector<1x128xf32>
    %cst_25 = arith.constant 0.000000e+00 : f32
    %31 = vector.broadcast %cst_25 : f32 to vector<1x128xf32>
    %32 = arith.subf %31, %30 : vector<1x128xf32>
    %33 = tpu.concatenate %28, %32 in 0 : vector<3x128xf32>, vector<1x128xf32> -> vector<4x128xf32>
    %34 = math.exp %33 : vector<4x128xf32>
    %35 = arith.mulf %1, %34 : vector<4x128xf32>
    %36 = arith.addf %35, %25 : vector<4x128xf32>
    %37 = tpu.concatenate %36, %0 in 0 : vector<4x128xf32>, vector<4x128xf32> -> vector<8x128xf32>
    %c0_26 = arith.constant 0 : index
    %c0_27 = arith.constant 0 : index
    %38 = vector.load %arg10[%c0_26, %c0_27] : memref<8x128xf32, #tpu.memory_space<vmem>>, vector<8x128xf32>
    tpu.vector_store %arg10[%c0_26, %c0_27], %37 {strides = array<i32>} : memref<8x128xf32, #tpu.memory_space<vmem>>, vector<8x128xf32>,
    return
  }
  func.func @transform_0(%arg0: i32) -> (i32, i32) {
    %c0_i32 = arith.constant 0 : i32
    %c0_i32_0 = arith.constant 0 : i32
    return %c0_i32, %arg0 : i32, i32
  }
  func.func @transform_1(%arg0: i32) -> (i32, i32) {
    %c0_i32 = arith.constant 0 : i32
    %c0_i32_0 = arith.constant 0 : i32
    %c0_i32_1 = arith.constant 0 : i32
    return %c0_i32, %c0_i32_0 : i32, i32
  }
  func.func @transform_2(%arg0: i32) -> (i32, i32) {
    %c0_i32 = arith.constant 0 : i32
    %c0_i32_0 = arith.constant 0 : i32
    %c0_i32_1 = arith.constant 0 : i32
    return %c0_i32, %c0_i32_0 : i32, i32
  }
  func.func @transform_3(%arg0: i32) -> (i32, i32) {
    %c0_i32 = arith.constant 0 : i32
    %c0_i32_0 = arith.constant 0 : i32
    %c0_i32_1 = arith.constant 0 : i32
    return %c0_i32, %c0_i32_0 : i32, i32
  }
  func.func @transform_4(%arg0: i32) -> (i32, i32) {
    %c0_i32 = arith.constant 0 : i32
    %c0_i32_0 = arith.constant 0 : i32
    %c0_i32_1 = arith.constant 0 : i32
    return %c0_i32, %c0_i32_0 : i32, i32
  }
  func.func @transform_5(%arg0: i32) -> (i32, i32) {
    %c0_i32 = arith.constant 0 : i32
    %c0_i32_0 = arith.constant 0 : i32
    %c0_i32_1 = arith.constant 0 : i32
    return %c0_i32, %c0_i32_0 : i32, i32
  }
  func.func @transform_6(%arg0: i32) -> (i32, i32) {
    %c0_i32 = arith.constant 0 : i32
    %c0_i32_0 = arith.constant 0 : i32
    %c0_i32_1 = arith.constant 0 : i32
    return %c0_i32, %c0_i32_0 : i32, i32
  }
  func.func @transform_7(%arg0: i32) -> (i32, i32) {
    %c0_i32 = arith.constant 0 : i32
    %c0_i32_0 = arith.constant 0 : i32
    %c0_i32_1 = arith.constant 0 : i32
    return %c0_i32, %c0_i32_0 : i32, i32
  }
  func.func @transform_8(%arg0: i32) -> (i32, i32) {
    %c0_i32 = arith.constant 0 : i32
    %c0_i32_0 = arith.constant 0 : i32
    %c0_i32_1 = arith.constant 0 : i32
    return %c0_i32, %c0_i32_0 : i32, i32
  }
  func.func @transform_9(%arg0: i32) -> (i32, i32) {
    %c0_i32 = arith.constant 0 : i32
    %c0_i32_0 = arith.constant 0 : i32
    return %c0_i32, %arg0 : i32, i32
  }
}

</mosaic_0001>

<llo_original>
// kernel: tpu_custom_call.1
$region0: #{tpu_custom_call.1}
  #allocation0 [shape = 'u32[]', space=smem, size = 0x4, offset = 0x4, fixed_abs, tag = 'smem constant byte address 0x4 - core index']
  #allocation1 [shape = 'u32[144,128]{1,0:T(1,128)}', space=vmem, size = 0x12000, scoped, tag = 'internal scratch']
  %s0 = inlined_call_operand.vmem [shape: f32[8,128], index: 0, kind: input, shape index: {}]
  %s1 = inlined_call_operand.vmem [shape: f32[32,4], index: 1, kind: input, shape index: {}]
  %s2 = inlined_call_operand.vmem [shape: f32[32,1], index: 2, kind: input, shape index: {}]
  %s3 = inlined_call_operand.vmem [shape: f32[32,32], index: 3, kind: input, shape index: {}]
  %s4 = inlined_call_operand.vmem [shape: f32[32,1], index: 4, kind: input, shape index: {}]
  %s5 = inlined_call_operand.vmem [shape: f32[3,32], index: 5, kind: input, shape index: {}]
  %s6 = inlined_call_operand.vmem [shape: f32[3,1], index: 6, kind: input, shape index: {}]
  %s7 = inlined_call_operand.vmem [shape: f32[4,32], index: 7, kind: input, shape index: {}]
  %s8 = inlined_call_operand.vmem [shape: f32[4,1], index: 8, kind: input, shape index: {}]
  %s9 = inlined_call_operand.hbm [shape: f32[8,128], index: 9, kind: output, shape index: {}]
  %s10 = sld [smem:[#allocation0]]
  $region46: #{tpu_custom_call.1} parent=0
    _
  %s12 = ssub.s32 1, %s10
  %s13 = scalar_select 0, %s12, %s10
  $region1: #{tpu_custom_call.1} parent=0
    #allocation2 [shape = 'u8[4096]{0}', space=vmem, size = 0x1000, scoped, tag = 'output window, operand 0, single buffered']
    #allocation3 [shape = 's32[1]{0}', space=sflag, size = 0x4, scoped, tag = 'scoped memory for tpu_custom_call.1']
    %14 = vsyncpa [#allocation3], 0
    // Predicated region
    $region2: #{tpu_custom_call.1} parent=1 // pred_check
      _
    $region3: #{tpu_custom_call.1} parent=1 // pred_check_branch
      %16 = sbr.rel (0) target = $region5
    $region4: #{tpu_custom_call.1} parent=1 // pred_region
      _
    $region5: #{tpu_custom_call.1} parent=1 // pred_fallthru
      _
    // Predicated region
    $region6: #{tpu_custom_call.1} parent=1 // pred_check
      _
    $region7: #{tpu_custom_call.1} parent=1 // pred_check_branch
      %18 = sbr.rel (0) target = $region9
    $region8: #{tpu_custom_call.1} parent=1 // pred_region
      _
    $region9: #{tpu_custom_call.1} parent=1 // pred_fallthru
      _
    // Predicated region
    $region10: #{tpu_custom_call.1} parent=1 // pred_check
      _
    $region11: #{tpu_custom_call.1} parent=1 // pred_check_branch
      %20 = sbr.rel (0) target = $region13
    $region12: #{tpu_custom_call.1} parent=1 // pred_region
      _
    $region13: #{tpu_custom_call.1} parent=1 // pred_fallthru
      _
    // Predicated region
    $region14: #{tpu_custom_call.1} parent=1 // pred_check
      _
    $region15: #{tpu_custom_call.1} parent=1 // pred_check_branch
      %22 = sbr.rel (0) target = $region17
    $region16: #{tpu_custom_call.1} parent=1 // pred_region
      _
    $region17: #{tpu_custom_call.1} parent=1 // pred_fallthru
      _
    // Predicated region
    $region18: #{tpu_custom_call.1} parent=1 // pred_check
      _
    $region19: #{tpu_custom_call.1} parent=1 // pred_check_branch
      %24 = sbr.rel (0) target = $region21
    $region20: #{tpu_custom_call.1} parent=1 // pred_region
      _
    $region21: #{tpu_custom_call.1} parent=1 // pred_fallthru
      _
    // Predicated region
    $region22: #{tpu_custom_call.1} parent=1 // pred_check
      _
    $region23: #{tpu_custom_call.1} parent=1 // pred_check_branch
      %26 = sbr.rel (0) target = $region25
    $region24: #{tpu_custom_call.1} parent=1 // pred_region
      _
    $region25: #{tpu_custom_call.1} parent=1 // pred_fallthru
      _
    // Predicated region
    $region26: #{tpu_custom_call.1} parent=1 // pred_check
      _
    $region27: #{tpu_custom_call.1} parent=1 // pred_check_branch
      %28 = sbr.rel (0) target = $region29
    $region28: #{tpu_custom_call.1} parent=1 // pred_region
      _
    $region29: #{tpu_custom_call.1} parent=1 // pred_fallthru
      _
    // Predicated region
    $region30: #{tpu_custom_call.1} parent=1 // pred_check
      _
    $region31: #{tpu_custom_call.1} parent=1 // pred_check_branch
      %30 = sbr.rel (0) target = $region33
    $region32: #{tpu_custom_call.1} parent=1 // pred_region
      _
    $region33: #{tpu_custom_call.1} parent=1 // pred_fallthru
      _
    // Predicated region
    $region34: #{tpu_custom_call.1} parent=1 // pred_check
      _
    $region35: #{tpu_custom_call.1} parent=1 // pred_check_branch
      %32 = sbr.rel (0) target = $region37
    $region36: #{tpu_custom_call.1} parent=1 // pred_region
      _
    $region37: #{tpu_custom_call.1} parent=1 // pred_fallthru
      _
    %v33 = vld [vmem:[%s0] sm:$0xf]
    %v34 = vld [vmem:[%s0 + $0x4] sm:$0xf]
    %v35 = vld [vmem:[%s1] sm:$0xff]
    %v36 = vld [vmem:[%s1 + $0x8] sm:$0xff]
    %v37 = vld [vmem:[%s1 + $0x10] sm:$0xff]
    %v38 = vld [vmem:[%s1 + $0x18] sm:$0xff]
    %v39 = vld [vmem:[%s2] sm:$0xff]
    %v40 = vld [vmem:[%s2 + $0x8] sm:$0xff]
    %v41 = vld [vmem:[%s2 + $0x10] sm:$0xff]
    %v42 = vld [vmem:[%s2 + $0x18] sm:$0xff]
    %44 = vset.pattern.permute.xlu0 0
    %45 = vperm.xlu0 %44, %v39
    %v46 = vpop.permute.xlu0 %45
    %49 = vset.pattern.permute.xlu0 0
    %50 = vperm.xlu0 %49, %v40
    %v51 = vpop.permute.xlu0 %50
    %54 = vset.pattern.permute.xlu0 0
    %55 = vperm.xlu0 %54, %v41
    %v56 = vpop.permute.xlu0 %55
    %59 = vset.pattern.permute.xlu0 0
    %60 = vperm.xlu0 %59, %v42
    %v61 = vpop.permute.xlu0 %60
    %vm63 = vcmask 31744
    %v65 = vsel %vm63, %v35, 0
    %v68 = vsel %vm63, %v36, 0
    %v71 = vsel %vm63, %v37, 0
    %v74 = vsel %vm63, %v38, 0
    %vm76 = vcmask 1043456
    %v78 = vsel %vm76, %v33, 0
    %80 = vmatprep.subr.mxu0 0.0
    %81 = vmatpush1.msra.mxu0 %v78
    %82 = vmatprep.subr.mxu0 0.0
    %83 = vmatpush1.msra.mxu0 0.0
    %84 = vmatprep.subr.mxu0 0.0
    %85 = vmatpush1.msra.mxu0 0.0
    %86 = vmatprep.subr.mxu0 0.0
    %87 = vmatpush1.msra.mxu0 0.0
    %88 = vmatprep.subr.mxu0 0.0
    %89 = vmatpush1.msra.mxu0 0.0
    %90 = vmatprep.subr.mxu0 0.0
    %91 = vmatpush1.msra.mxu0 0.0
    %92 = vmatprep.subr.mxu0 0.0
    %93 = vmatpush1.msra.mxu0 0.0
    %94 = vmatprep.subr.mxu0 0.0
    %95 = vmatpush1.msra.mxu0 0.0
    %96 = vmatprep.subr.mxu0 0.0
    %97 = vmatpush1.msra.mxu0 0.0
    %98 = vmatprep.subr.mxu0 0.0
    %99 = vmatpush1.msra.mxu0 0.0
    %100 = vmatprep.subr.mxu0 0.0
    %101 = vmatpush1.msra.mxu0 0.0
    %102 = vmatprep.subr.mxu0 0.0
    %103 = vmatpush1.msra.mxu0 0.0
    %104 = vmatprep.subr.mxu0 0.0
    %105 = vmatpush1.msra.mxu0 0.0
    %106 = vmatprep.subr.mxu0 0.0
    %107 = vmatpush1.msra.mxu0 0.0
    %108 = vmatprep.subr.mxu0 0.0
    %109 = vmatpush1.msra.mxu0 0.0
    %110 = vmatprep.subr.mxu0 0.0
    %111 = vmatpush1.msra.mxu0 0.0
    %112 = vmatprep.subr.mxu0 0.0
    %113 = vmatpush1.msra.mxu0 0.0
    %114 = vmatprep.subr.mxu0 0.0
    %115 = vmatpush1.msra.mxu0 0.0
    %116 = vmatprep.subr.mxu0 0.0
    %117 = vmatpush1.msra.mxu0 0.0
    %118 = vmatprep.subr.mxu0 0.0
    %119 = vmatpush1.msra.mxu0 0.0
    %120 = vmatprep.subr.mxu0 0.0
    %121 = vmatpush1.msra.mxu0 0.0
    %122 = vmatprep.subr.mxu0 0.0
    %123 = vmatpush1.msra.mxu0 0.0
    %124 = vmatprep.subr.mxu0 0.0
    %125 = vmatpush1.msra.mxu0 0.0
    %126 = vmatprep.subr.mxu0 0.0
    %127 = vmatpush1.msra.mxu0 0.0
    %128 = vmatprep.subr.mxu0 0.0
    %129 = vmatpush1.msra.mxu0 0.0
    %130 = vmatprep.subr.mxu0 0.0
    %131 = vmatpush1.msra.mxu0 0.0
    %132 = vmatprep.subr.mxu0 0.0
    %133 = vmatpush1.msra.mxu0 0.0
    %134 = vmatprep.subr.mxu0 0.0
    %135 = vmatpush1.msra.mxu0 0.0
    %136 = vmatprep.subr.mxu0 0.0
    %137 = vmatpush1.msra.mxu0 0.0
    %138 = vmatprep.subr.mxu0 0.0
    %139 = vmatpush1.msra.mxu0 0.0
    %140 = vmatprep.subr.mxu0 0.0
    %141 = vmatpush1.msra.mxu0 0.0
    %142 = vmatprep.subr.mxu0 0.0
    %143 = vmatpush1.msra.mxu0 0.0
    %144 = vmatprep.mubr.f32.mxu0 0.0
    %145 = vmatmul.mubr.f32.gmra.mrb[0].mxu0 %v65
    %v146 = vpop.f32.mrb[0].mxu0
    %v147 = vadd.f32 %v46, %v146
    %v148 = vpop.f32.mrb[0].mxu0
    %149 = vmatprep.mubr.f32.mxu0 0.0
    %150 = vmatmul.mubr.f32.gmra.mrb[0].mxu0 %v68
    %v151 = vpop.f32.mrb[0].mxu0
    %v152 = vadd.f32 %v51, %v151
    %v153 = vpop.f32.mrb[0].mxu0
    %154 = vmatprep.mubr.f32.mxu0 0.0
    %155 = vmatmul.mubr.f32.gmra.mrb[0].mxu0 %v71
    %v156 = vpop.f32.mrb[0].mxu0
    %v157 = vadd.f32 %v56, %v156
    %v158 = vpop.f32.mrb[0].mxu0
    %159 = vmatprep.mubr.f32.mxu0 0.0
    %160 = vmatmul.mubr.f32.gmra.mrb[0].mxu0 %v74
    %v161 = vpop.f32.mrb[0].mxu0
    %v162 = vadd.f32 %v61, %v161
    %v163 = vpop.f32.mrb[0].mxu0
    %164 = vdwg.mxu0
    %v165 = vmax.f32 %v147, 0.0
    %v166 = vmax.f32 %v152, 0.0
    %v167 = vmax.f32 %v157, 0.0
    %v168 = vmax.f32 %v162, 0.0
    %v169 = vld [vmem:[%s3] sm:$0xff]
    %v170 = vld [vmem:[%s3 + $0x8] sm:$0xff]
    %v171 = vld [vmem:[%s3 + $0x10] sm:$0xff]
    %v172 = vld [vmem:[%s3 + $0x18] sm:$0xff]
    %v173 = vld [vmem:[%s4] sm:$0xff]
    %v174 = vld [vmem:[%s4 + $0x8] sm:$0xff]
    %v175 = vld [vmem:[%s4 + $0x10] sm:$0xff]
    %v176 = vld [vmem:[%s4 + $0x18] sm:$0xff]
    %178 = vset.pattern.permute.xlu0 0
    %179 = vperm.xlu0 %178, %v173
    %v180 = vpop.permute.xlu0 %179
    %183 = vset.pattern.permute.xlu0 0
    %184 = vperm.xlu0 %183, %v174
    %v185 = vpop.permute.xlu0 %184
    %188 = vset.pattern.permute.xlu0 0
    %189 = vperm.xlu0 %188, %v175
    %v190 = vpop.permute.xlu0 %189
    %193 = vset.pattern.permute.xlu0 0
    %194 = vperm.xlu0 %193, %v176
    %v195 = vpop.permute.xlu0 %194
    %vm197 = vcmask 261120
    %v199 = vsel %vm197, %v169, 0
    %v202 = vsel %vm197, %v170, 0
    %v205 = vsel %vm197, %v171, 0
    %v208 = vsel %vm197, %v172, 0
    %210 = vmatprep.subr.mxu0 0.0
    %211 = vmatpush1.msra.mxu0 %v165
    %212 = vmatprep.subr.mxu0 0.0
    %213 = vmatpush1.msra.mxu0 %v166
    %214 = vmatprep.subr.mxu0 0.0
    %215 = vmatpush1.msra.mxu0 %v167
    %216 = vmatprep.subr.mxu0 0.0
    %217 = vmatpush1.msra.mxu0 %v168
    %218 = vmatprep.subr.mxu0 0.0
    %219 = vmatpush1.msra.mxu0 0.0
    %220 = vmatprep.subr.mxu0 0.0
    %221 = vmatpush1.msra.mxu0 0.0
    %222 = vmatprep.subr.mxu0 0.0
    %223 = vmatpush1.msra.mxu0 0.0
    %224 = vmatprep.subr.mxu0 0.0
    %225 = vmatpush1.msra.mxu0 0.0
    %226 = vmatprep.subr.mxu0 0.0
    %227 = vmatpush1.msra.mxu0 0.0
    %228 = vmatprep.subr.mxu0 0.0
    %229 = vmatpush1.msra.mxu0 0.0
    %230 = vmatprep.subr.mxu0 0.0
    %231 = vmatpush1.msra.mxu0 0.0
    %232 = vmatprep.subr.mxu0 0.0
    %233 = vmatpush1.msra.mxu0 0.0
    %234 = vmatprep.subr.mxu0 0.0
    %235 = vmatpush1.msra.mxu0 0.0
    %236 = vmatprep.subr.mxu0 0.0
    %237 = vmatpush1.msra.mxu0 0.0
    %238 = vmatprep.subr.mxu0 0.0
    %239 = vmatpush1.msra.mxu0 0.0
    %240 = vmatprep.subr.mxu0 0.0
    %241 = vmatpush1.msra.mxu0 0.0
    %242 = vmatprep.subr.mxu0 0.0
    %243 = vmatpush1.msra.mxu0 0.0
    %244 = vmatprep.subr.mxu0 0.0
    %245 = vmatpush1.msra.mxu0 0.0
    %246 = vmatprep.subr.mxu0 0.0
    %247 = vmatpush1.msra.mxu0 0.0
    %248 = vmatprep.subr.mxu0 0.0
    %249 = vmatpush1.msra.mxu0 0.0
    %250 = vmatprep.subr.mxu0 0.0
    %251 = vmatpush1.msra.mxu0 0.0
    %252 = vmatprep.subr.mxu0 0.0
    %253 = vmatpush1.msra.mxu0 0.0
    %254 = vmatprep.subr.mxu0 0.0
    %255 = vmatpush1.msra.mxu0 0.0
    %256 = vmatprep.subr.mxu0 0.0
    %257 = vmatpush1.msra.mxu0 0.0
    %258 = vmatprep.subr.mxu0 0.0
    %259 = vmatpush1.msra.mxu0 0.0
    %260 = vmatprep.subr.mxu0 0.0
    %261 = vmatpush1.msra.mxu0 0.0
    %262 = vmatprep.subr.mxu0 0.0
    %263 = vmatpush1.msra.mxu0 0.0
    %264 = vmatprep.subr.mxu0 0.0
    %265 = vmatpush1.msra.mxu0 0.0
    %266 = vmatprep.subr.mxu0 0.0
    %267 = vmatpush1.msra.mxu0 0.0
    %268 = vmatprep.subr.mxu0 0.0
    %269 = vmatpush1.msra.mxu0 0.0
    %270 = vmatprep.subr.mxu0 0.0
    %271 = vmatpush1.msra.mxu0 0.0
    %272 = vmatprep.subr.mxu0 0.0
    %273 = vmatpush1.msra.mxu0 0.0
    %274 = vmatprep.mubr.f32.mxu0 0.0
    %275 = vmatmul.mubr.f32.gmra.mrb[0].mxu0 %v199
    %v276 = vpop.f32.mrb[0].mxu0
    %v277 = vadd.f32 %v180, %v276
    %v278 = vpop.f32.mrb[0].mxu0
    %279 = vmatprep.mubr.f32.mxu0 0.0
    %280 = vmatmul.mubr.f32.gmra.mrb[0].mxu0 %v202
    %v281 = vpop.f32.mrb[0].mxu0
    %v282 = vadd.f32 %v185, %v281
    %v283 = vpop.f32.mrb[0].mxu0
    %284 = vmatprep.mubr.f32.mxu0 0.0
    %285 = vmatmul.mubr.f32.gmra.mrb[0].mxu0 %v205
    %v286 = vpop.f32.mrb[0].mxu0
    %v287 = vadd.f32 %v190, %v286
    %v288 = vpop.f32.mrb[0].mxu0
    %289 = vmatprep.mubr.f32.mxu0 0.0
    %290 = vmatmul.mubr.f32.gmra.mrb[0].mxu0 %v208
    %v291 = vpop.f32.mrb[0].mxu0
    %v292 = vadd.f32 %v195, %v291
    %v293 = vpop.f32.mrb[0].mxu0
    %294 = vdwg.mxu0
    %v295 = vmax.f32 %v277, 0.0
    %v296 = vmax.f32 %v282, 0.0
    %v297 = vmax.f32 %v287, 0.0
    %v298 = vmax.f32 %v292, 0.0
    %v299 = vld [vmem:[%s5] sm:$0x7]
    %v300 = vld [vmem:[%s6] sm:$0x7]
    %302 = vset.pattern.permute.xlu0 0
    %303 = vperm.xlu0 %302, %v300
    %v304 = vpop.permute.xlu0 %303
    %v307 = vsel %vm197, %v299, 0
    %309 = vmatprep.subr.mxu0 0.0
    %310 = vmatpush1.msra.mxu0 %v295
    %311 = vmatprep.subr.mxu0 0.0
    %312 = vmatpush1.msra.mxu0 %v296
    %313 = vmatprep.subr.mxu0 0.0
    %314 = vmatpush1.msra.mxu0 %v297
    %315 = vmatprep.subr.mxu0 0.0
    %316 = vmatpush1.msra.mxu0 %v298
    %317 = vmatprep.subr.mxu0 0.0
    %318 = vmatpush1.msra.mxu0 0.0
    %319 = vmatprep.subr.mxu0 0.0
    %320 = vmatpush1.msra.mxu0 0.0
    %321 = vmatprep.subr.mxu0 0.0
    %322 = vmatpush1.msra.mxu0 0.0
    %323 = vmatprep.subr.mxu0 0.0
    %324 = vmatpush1.msra.mxu0 0.0
    %325 = vmatprep.subr.mxu0 0.0
    %326 = vmatpush1.msra.mxu0 0.0
    %327 = vmatprep.subr.mxu0 0.0
    %328 = vmatpush1.msra.mxu0 0.0
    %329 = vmatprep.subr.mxu0 0.0
    %330 = vmatpush1.msra.mxu0 0.0
    %331 = vmatprep.subr.mxu0 0.0
    %332 = vmatpush1.msra.mxu0 0.0
    %333 = vmatprep.subr.mxu0 0.0
    %334 = vmatpush1.msra.mxu0 0.0
    %335 = vmatprep.subr.mxu0 0.0
    %336 = vmatpush1.msra.mxu0 0.0
    %337 = vmatprep.subr.mxu0 0.0
    %338 = vmatpush1.msra.mxu0 0.0
    %339 = vmatprep.subr.mxu0 0.0
    %340 = vmatpush1.msra.mxu0 0.0
    %341 = vmatprep.subr.mxu0 0.0
    %342 = vmatpush1.msra.mxu0 0.0
    %343 = vmatprep.subr.mxu0 0.0
    %344 = vmatpush1.msra.mxu0 0.0
    %345 = vmatprep.subr.mxu0 0.0
    %346 = vmatpush1.msra.mxu0 0.0
    %347 = vmatprep.subr.mxu0 0.0
    %348 = vmatpush1.msra.mxu0 0.0
    %349 = vmatprep.subr.mxu0 0.0
    %350 = vmatpush1.msra.mxu0 0.0
    %351 = vmatprep.subr.mxu0 0.0
    %352 = vmatpush1.msra.mxu0 0.0
    %353 = vmatprep.subr.mxu0 0.0
    %354 = vmatpush1.msra.mxu0 0.0
    %355 = vmatprep.subr.mxu0 0.0
    %356 = vmatpush1.msra.mxu0 0.0
    %357 = vmatprep.subr.mxu0 0.0
    %358 = vmatpush1.msra.mxu0 0.0
    %359 = vmatprep.subr.mxu0 0.0
    %360 = vmatpush1.msra.mxu0 0.0
    %361 = vmatprep.subr.mxu0 0.0
    %362 = vmatpush1.msra.mxu0 0.0
    %363 = vmatprep.subr.mxu0 0.0
    %364 = vmatpush1.msra.mxu0 0.0
    %365 = vmatprep.subr.mxu0 0.0
    %366 = vmatpush1.msra.mxu0 0.0
    %367 = vmatprep.subr.mxu0 0.0
    %368 = vmatpush1.msra.mxu0 0.0
    %369 = vmatprep.subr.mxu0 0.0
    %370 = vmatpush1.msra.mxu0 0.0
    %371 = vmatprep.subr.mxu0 0.0
    %372 = vmatpush1.msra.mxu0 0.0
    %373 = vmatprep.mubr.f32.mxu0 0.0
    %374 = vmatmul.mubr.f32.gmra.mrb[0].mxu0 %v307
    %v375 = vpop.f32.mrb[0].mxu0
    %v376 = vadd.f32 %v304, %v375
    %v377 = vpop.f32.mrb[0].mxu0
    %378 = vdwg.mxu0
    %v379 = vld [vmem:[%s7] sm:$0xf]
    %v380 = vld [vmem:[%s8] sm:$0xf]
    %382 = vset.pattern.permute.xlu0 0
    %383 = vperm.xlu0 %382, %v380
    %v384 = vpop.permute.xlu0 %383
    %v387 = vsel %vm197, %v379, 0
    %389 = vmatprep.subr.mxu0 0.0
    %390 = vmatpush1.msra.mxu0 %v295
    %391 = vmatprep.subr.mxu0 0.0
    %392 = vmatpush1.msra.mxu0 %v296
    %393 = vmatprep.subr.mxu0 0.0
    %394 = vmatpush1.msra.mxu0 %v297
    %395 = vmatprep.subr.mxu0 0.0
    %396 = vmatpush1.msra.mxu0 %v298
    %397 = vmatprep.subr.mxu0 0.0
    %398 = vmatpush1.msra.mxu0 0.0
    %399 = vmatprep.subr.mxu0 0.0
    %400 = vmatpush1.msra.mxu0 0.0
    %401 = vmatprep.subr.mxu0 0.0
    %402 = vmatpush1.msra.mxu0 0.0
    %403 = vmatprep.subr.mxu0 0.0
    %404 = vmatpush1.msra.mxu0 0.0
    %405 = vmatprep.subr.mxu0 0.0
    %406 = vmatpush1.msra.mxu0 0.0
    %407 = vmatprep.subr.mxu0 0.0
    %408 = vmatpush1.msra.mxu0 0.0
    %409 = vmatprep.subr.mxu0 0.0
    %410 = vmatpush1.msra.mxu0 0.0
    %411 = vmatprep.subr.mxu0 0.0
    %412 = vmatpush1.msra.mxu0 0.0
    %413 = vmatprep.subr.mxu0 0.0
    %414 = vmatpush1.msra.mxu0 0.0
    %415 = vmatprep.subr.mxu0 0.0
    %416 = vmatpush1.msra.mxu0 0.0
    %417 = vmatprep.subr.mxu0 0.0
    %418 = vmatpush1.msra.mxu0 0.0
    %419 = vmatprep.subr.mxu0 0.0
    %420 = vmatpush1.msra.mxu0 0.0
    %421 = vmatprep.subr.mxu0 0.0
    %422 = vmatpush1.msra.mxu0 0.0
    %423 = vmatprep.subr.mxu0 0.0
    %424 = vmatpush1.msra.mxu0 0.0
    %425 = vmatprep.subr.mxu0 0.0
    %426 = vmatpush1.msra.mxu0 0.0
    %427 = vmatprep.subr.mxu0 0.0
    %428 = vmatpush1.msra.mxu0 0.0
    %429 = vmatprep.subr.mxu0 0.0
    %430 = vmatpush1.msra.mxu0 0.0
    %431 = vmatprep.subr.mxu0 0.0
    %432 = vmatpush1.msra.mxu0 0.0
    %433 = vmatprep.subr.mxu0 0.0
    %434 = vmatpush1.msra.mxu0 0.0
    %435 = vmatprep.subr.mxu0 0.0
    %436 = vmatpush1.msra.mxu0 0.0
    %437 = vmatprep.subr.mxu0 0.0
    %438 = vmatpush1.msra.mxu0 0.0
    %439 = vmatprep.subr.mxu0 0.0
    %440 = vmatpush1.msra.mxu0 0.0
    %441 = vmatprep.subr.mxu0 0.0
    %442 = vmatpush1.msra.mxu0 0.0
    %443 = vmatprep.subr.mxu0 0.0
    %444 = vmatpush1.msra.mxu0 0.0
    %445 = vmatprep.subr.mxu0 0.0
    %446 = vmatpush1.msra.mxu0 0.0
    %447 = vmatprep.subr.mxu0 0.0
    %448 = vmatpush1.msra.mxu0 0.0
    %449 = vmatprep.subr.mxu0 0.0
    %450 = vmatpush1.msra.mxu0 0.0
    %451 = vmatprep.subr.mxu0 0.0
    %452 = vmatpush1.msra.mxu0 0.0
    %453 = vmatprep.mubr.f32.mxu0 0.0
    %454 = vmatmul.mubr.f32.gmra.mrb[0].mxu0 %v387
    %v455 = vpop.f32.mrb[0].mxu0
    %v456 = vadd.f32 %v384, %v455
    %v457 = vpop.f32.mrb[0].mxu0
    %458 = vdwg.mxu0
    %v459 = vtanh.pop %v376
    %v460 = vmul.f32 %v459, 0.1
    %vm461 = vcmask 1042432
    %v462 = vsel %vm461, %v460, 0.0
    %v463 = vrot.slane %v462, 4
    %v464 = vadd.f32 %v462, %v463
    %v465 = vrot.slane %v464, 2
    %v466 = vadd.f32 %v464, %v465
    %v467 = vrot.slane %v466, 1
    %v468 = vadd.f32 %v466, %v467
    %v469 = vsub.f32 0.0, %v468
    %v470 = vsel %vm461, %v460, %v469
    %v471 = vmul.f32 %v470, 1.442695
    %v472 = vpow.pop %v471
    %v473 = vmul.f32 %v34, %v472
    %v474 = vadd.f32 %v473, %v456
    %v475 = vrot.slane %v33, 4
    %v477 = vsel %vm76, %v474, %v475
    %478 = vst [vmem:[#allocation2] sm:$0xff] %v477
    // Predicated region
    $region38: #{tpu_custom_call.1} parent=1 // pred_check
      _
    $region39: #{tpu_custom_call.1} parent=1 // pred_check_branch
      %480 = sbr.rel (0) target = $region41
    $region40: #{tpu_custom_call.1} parent=1 // pred_region
      %s482 = ssub.s32 128, 128
      %483 = vsyncadd [#allocation3], %s482
      %s485 = sshll.u32 [#allocation2], 4
      %s486 = int_to_ptr.vmem [resolvable:$true] %s485
      %488 = dma.vmem_to_hbm [thread:$0]  %s486, 128, %s9, [#allocation3]
    $region41: #{tpu_custom_call.1} parent=1 // pred_fallthru
      _
    // Predicated region
    $region42: #{tpu_custom_call.1} parent=1 // pred_check
      _
    $region43: #{tpu_custom_call.1} parent=1 // pred_check_branch
      %490 = sbr.rel (0) target = $region45
    $region44: #{tpu_custom_call.1} parent=1 // pred_region
      %491 = dma.done [#allocation3], 128
    $region45: #{tpu_custom_call.1} parent=1 // pred_fallthru
      _
    %492 = vsyncpa [#allocation3], 1

</llo_original>
